<compile_context>
chip_gen: v6e
topology: v6e:2x2x1
jax: 0.10.0
libtpu: 0.0.40
codegen_flags: <defaults>
</compile_context>

<pallas_src>
import jax
import jax.numpy as jnp
from jax import lax
from jax.experimental import pallas as pl
from jax.experimental.pallas import tpu as pltpu


def _mlp_kernel(*refs):
    """refs = (x_ref, w0T, b0, w1T, b1, ..., w_lastT, b_last, out_ref).

    All weights arrive pre-transposed to (out, in); all biases as (out, 1).
    Activations live as (features, tile_n): node dim on lanes throughout.
    """
    x_ref = refs[0]
    out_ref = refs[-1]
    wb = refs[1:-1]
    n_layers = len(wb) // 2

    # x tile is (tile_n, d_in), possibly bf16: upcast once (cheap VPU cast;
    # v5e has no bf16 VALU, v6e/v7x don't care).
    x = x_ref[...].astype(jnp.float32)

    # Layer 0: contract the feature axis of x against W0 (h0, d_in)
    # -> (h0, tile_n); node dim lands on lanes for the rest of the network.
    w0 = wb[0][...]                                    # (h0, d_in)
    b0 = wb[1][...]                                    # (h0, 1)
    h = lax.dot_general(
        w0, x,
        dimension_numbers=(((1,), (1,)), ((), ())),
        preferred_element_type=jnp.float32,
    ) + b0
    h = jnp.maximum(h, 0.0)                            # .relu()

    # Remaining hidden layers: (out, in) @ (in, tile_n) -> (out, tile_n).
    for layer in range(1, n_layers - 1):
        w = wb[2 * layer][...]                         # (out, in)
        b = wb[2 * layer + 1][...]                     # (out, 1)
        h = jnp.dot(w, h, preferred_element_type=jnp.float32) + b
        h = jnp.maximum(h, 0.0)

    # Final layer: (1, hidden) @ (hidden, tile_n) -> lane-dense (1, tile_n).
    w_last = wb[-2][...]                               # (1, hidden)
    b_last = wb[-1][...]                               # (1, 1)
    y = jnp.dot(w_last, h, preferred_element_type=jnp.float32) + b_last
    out_ref[...] = y.astype(out_ref.dtype)


def _pick_tile_n(n_pad, max_tile=4096):
    """Largest multiple-of-128 divisor of n_pad (<= max_tile), preferring to
    keep >= 2 grid steps so v7x's two TensorCores both get work."""
    if n_pad <= 256:
        return n_pad
    cands = [t for t in range(128, min(n_pad, max_tile) + 1, 128)
             if n_pad % t == 0]
    if not cands:
        return n_pad
    two_step = [t for t in cands if n_pad // t >= 2]
    if two_step and two_step[-1] >= 256:
        return two_step[-1]
    return cands[-1]


def meta_mlp_forward(x, weights, biases, *, tile_n=None,
                     x_stream_dtype=jnp.bfloat16):
    """MetaMLP forward.

    x: (N, n_node_attr) float32
    weights[l]: (in_l, out_l)  (i.e. torch W.T); weights[-1] has out_dim == 1
    biases[l]:  (out_l,)
    tile_n: node tile (multiple of 128, or equal to the padded N). Default:
            auto-sized from N (cap 4096).
    x_stream_dtype: dtype used to stream x from HBM (bf16 halves the dominant
            HBM traffic; pass jnp.float32 to disable).
    """
    N, d_in = x.shape
    assert len(weights) >= 2 and len(weights) == len(biases)
    assert weights[0].shape[0] == d_in
    assert weights[-1].shape[1] == 1, "MetaMLP final layer has out_dim == 1"

    # Pad the node dim so a lane-dense tile always exists; padded rows are
    # sliced off the output below.
    if tile_n is None:
        n_pad = max(128, ((N + 127) // 128) * 128)
        tile_n = _pick_tile_n(n_pad)
    else:
        n_pad = ((N + tile_n - 1) // tile_n) * tile_n
    assert n_pad % tile_n == 0
    assert tile_n % 128 == 0 or tile_n == n_pad, (
        "tile_n must be a multiple of 128 (lane-dense output tile) or cover "
        "the whole padded node dim")

    x_in = x.astype(x_stream_dtype)
    if n_pad != N:
        x_in = jnp.pad(x_in, ((0, n_pad - N), (0, 0)))

    # Weights pre-transposed to (out, in); biases as (out, 1) lane-broadcast
    # columns. All are tiny, untiled and VMEM-resident across every grid step.
    wb_args, wb_specs = [], []
    for w, b in zip(weights, biases):
        w_t = jnp.asarray(w, jnp.float32).T            # (out, in)
        b_c = jnp.asarray(b, jnp.float32).reshape(-1, 1)  # (out, 1)
        wb_args += [w_t, b_c]
        wb_specs += [
            pl.BlockSpec(w_t.shape, lambda i: (0, 0)),
            pl.BlockSpec(b_c.shape, lambda i: (0, 0)),
        ]

    # Advisory cost estimate so XLA can schedule around the custom call.
    flops = sum(2 * n_pad * w.shape[0] * w.shape[1] for w in weights)
    bytes_accessed = (n_pad * d_in * jnp.dtype(x_stream_dtype).itemsize
                      + n_pad * 4)
    bytes_accessed += sum(int(w.size) * 4 for w in weights)
    bytes_accessed += sum(int(b.size) * 4 for b in biases)

    grid = (n_pad // tile_n,)
    out_t = pl.pallas_call(
        _mlp_kernel,
        out_shape=jax.ShapeDtypeStruct((1, n_pad), jnp.float32),  # lane-dense row
        grid_spec=pltpu.PrefetchScalarGridSpec(
            num_scalar_prefetch=0,
            grid=grid,
            in_specs=[pl.BlockSpec((tile_n, d_in), lambda i: (i, 0))] + wb_specs,
            out_specs=pl.BlockSpec((1, tile_n), lambda i: (0, i)),
        ),
        compiler_params=pltpu.CompilerParams(
            dimension_semantics=("parallel",),
        ),
        cost_estimate=pl.CostEstimate(
            flops=flops, transcendentals=0, bytes_accessed=bytes_accessed),
    )(x_in, *wb_args)

    # (1, n_pad) row -> (N, 1) column, dropping padded rows.
    return out_t.reshape(n_pad, 1)[:N]


def init_meta_mlp_params(key, n_node_attr, n_hidden, n_layers):
    """Deterministic init mirroring nn.Linear shapes (weights stored as (in, out))."""
    dims = [(n_node_attr, n_hidden)]
    if n_layers > 2:
        dims += [(n_hidden, n_hidden)] * (n_layers - 2)
    dims += [(n_hidden, 1)]

    weights, biases = [], []
    for (fan_in, fan_out) in dims:
        key, kw, kb = jax.random.split(key, 3)
        bound = 1.0 / jnp.sqrt(fan_in)
        weights.append(
            jax.random.uniform(kw, (fan_in, fan_out), jnp.float32, -bound, bound))
        biases.append(
            jax.random.uniform(kb, (fan_out,), jnp.float32, -bound, bound))
    return weights, biases


def meta_mlp_ref(x, weights, biases):
    """Pure-JAX reference for correctness checking."""
    h = x
    for w, b in zip(weights[:-1], biases[:-1]):
        h = jnp.maximum(h @ w + b, 0.0)
    return h @ weights[-1] + biases[-1]


if __name__ == "__main__":
    # Shapes consistent with the module's forward:
    #   N nodes = 1024, n_node_attr = 16, n_hidden = 32, n_layers = 3
    N, n_node_attr, n_hidden, n_layers = 1024, 16, 32, 3

    key = jax.random.PRNGKey(0)
    key, kx = jax.random.split(key)
    x = jax.random.normal(kx, (N, n_node_attr), jnp.float32)

    weights, biases = init_meta_mlp_params(key, n_node_attr, n_hidden, n_layers)

    out = meta_mlp_forward(x, weights, biases)   # auto tile_n (=512 -> grid of 2)
    out = jax.block_until_ready(out)
    assert out.shape == (N, 1), out.shape

    # The kernel streams x as bf16; compare against a reference fed the same
    # bf16-rounded x (same f32 accumulate / default MXU precision thereafter).
    x_rounded = x.astype(jnp.bfloat16).astype(jnp.float32)
    ref = meta_mlp_ref(x_rounded, weights, biases)
    assert jnp.allclose(out, ref, atol=1e-5, rtol=1e-5), "mismatch vs reference"

    # Sanity vs the full-f32 reference (bf16 input rounding only).
    ref_f32 = meta_mlp_ref(x, weights, biases)
    assert jnp.allclose(out, ref_f32, atol=5e-2, rtol=5e-2), "bf16 drift too large"

    print("KERNEL_OK")
</pallas_src>

<mosaic_0001>
module attributes {stable_mosaic.version = 11 : i64} {
  func.func @_mlp_kernel(%arg0: i32, %arg1: memref<512x16xbf16, #tpu.memory_space<vmem>>, %arg2: memref<32x16xf32, #tpu.memory_space<vmem>>, %arg3: memref<32x1xf32, #tpu.memory_space<vmem>>, %arg4: memref<32x32xf32, #tpu.memory_space<vmem>>, %arg5: memref<32x1xf32, #tpu.memory_space<vmem>>, %arg6: memref<1x32xf32, #tpu.memory_space<vmem>>, %arg7: memref<1x1xf32, #tpu.memory_space<vmem>>, %arg8: memref<1x512xf32, #tpu.memory_space<vmem>>) attributes {dimension_semantics = [#tpu.dimension_semantics<parallel>], iteration_bounds = array<i64: 2>, scalar_prefetch = 0 : i64, scratch_operands = 0 : i64, tpu.core_type = #tpu.core_type<tc>, window_params = [{transform_indices = @transform_0, window_bounds = array<i64: 512, 16>}, {pipeline_mode = #tpu.pipeline_mode<synchronous>, transform_indices = @transform_1, window_bounds = array<i64: 32, 16>}, {pipeline_mode = #tpu.pipeline_mode<synchronous>, transform_indices = @transform_2, window_bounds = array<i64: 32, 1>}, {pipeline_mode = #tpu.pipeline_mode<synchronous>, transform_indices = @transform_3, window_bounds = array<i64: 32, 32>}, {pipeline_mode = #tpu.pipeline_mode<synchronous>, transform_indices = @transform_4, window_bounds = array<i64: 32, 1>}, {pipeline_mode = #tpu.pipeline_mode<synchronous>, transform_indices = @transform_5, window_bounds = array<i64: 1, 32>}, {pipeline_mode = #tpu.pipeline_mode<synchronous>, transform_indices = @transform_6, window_bounds = array<i64: 1, 1>}, {transform_indices = @transform_7, window_bounds = array<i64: 1, 512>}]} {
    %c0 = arith.constant 0 : index
    %c0_0 = arith.constant 0 : index
    %0 = vector.load %arg1[%c0, %c0_0] : memref<512x16xbf16, #tpu.memory_space<vmem>>, vector<512x16xbf16>
    %1 = arith.extf %0 : vector<512x16xbf16> to vector<512x16xf32>
    %c0_1 = arith.constant 0 : index
    %c0_2 = arith.constant 0 : index
    %2 = vector.load %arg2[%c0_1, %c0_2] : memref<32x16xf32, #tpu.memory_space<vmem>>, vector<32x16xf32>
    %c0_3 = arith.constant 0 : index
    %c0_4 = arith.constant 0 : index
    %3 = vector.load %arg3[%c0_3, %c0_4] : memref<32x1xf32, #tpu.memory_space<vmem>>, vector<32x1xf32>
    %cst = arith.constant dense<0.000000e+00> : vector<32x512xf32>
    %4 = tpu.matmul %2, %1, %cst {dimension_numbers = #tpu.dot_dimension_numbers<[1], [1], [0], [0], [0, 0, 1, 0], [], []>} : vector<32x16xf32>, vector<512x16xf32>, vector<32x512xf32> -> vector<32x512xf32>
    %5 = vector.broadcast %3 : vector<32x1xf32> to vector<32x512xf32>
    %6 = arith.addf %4, %5 : vector<32x512xf32>
    %cst_5 = arith.constant 0.000000e+00 : f32
    %7 = vector.broadcast %cst_5 : f32 to vector<32x512xf32>
    %8 = arith.maximumf %6, %7 : vector<32x512xf32>
    %c0_6 = arith.constant 0 : index
    %c0_7 = arith.constant 0 : index
    %9 = vector.load %arg4[%c0_6, %c0_7] : memref<32x32xf32, #tpu.memory_space<vmem>>, vector<32x32xf32>
    %c0_8 = arith.constant 0 : index
    %c0_9 = arith.constant 0 : index
    %10 = vector.load %arg5[%c0_8, %c0_9] : memref<32x1xf32, #tpu.memory_space<vmem>>, vector<32x1xf32>
    %cst_10 = arith.constant dense<0.000000e+00> : vector<32x512xf32>
    %11 = tpu.matmul %9, %8, %cst_10 {dimension_numbers = #tpu.dot_dimension_numbers<[1], [0], [0], [1], [0, 0, 1, 1], [], []>} : vector<32x32xf32>, vector<32x512xf32>, vector<32x512xf32> -> vector<32x512xf32>
    %12 = vector.broadcast %10 : vector<32x1xf32> to vector<32x512xf32>
    %13 = arith.addf %11, %12 : vector<32x512xf32>
    %cst_11 = arith.constant 0.000000e+00 : f32
    %14 = vector.broadcast %cst_11 : f32 to vector<32x512xf32>
    %15 = arith.maximumf %13, %14 : vector<32x512xf32>
    %c0_12 = arith.constant 0 : index
    %c0_13 = arith.constant 0 : index
    %16 = vector.load %arg6[%c0_12, %c0_13] : memref<1x32xf32, #tpu.memory_space<vmem>>, vector<1x32xf32>
    %c0_14 = arith.constant 0 : index
    %c0_15 = arith.constant 0 : index
    %17 = vector.load %arg7[%c0_14, %c0_15] : memref<1x1xf32, #tpu.memory_space<vmem>>, vector<1x1xf32>
    %cst_16 = arith.constant dense<0.000000e+00> : vector<1x512xf32>
    %18 = tpu.matmul %16, %15, %cst_16 {dimension_numbers = #tpu.dot_dimension_numbers<[1], [0], [0], [1], [0, 0, 1, 1], [], []>} : vector<1x32xf32>, vector<32x512xf32>, vector<1x512xf32> -> vector<1x512xf32>
    %19 = vector.broadcast %17 : vector<1x1xf32> to vector<1x512xf32>
    %20 = arith.addf %18, %19 : vector<1x512xf32>
    %c0_17 = arith.constant 0 : index
    %c0_18 = arith.constant 0 : index
    %21 = vector.load %arg8[%c0_17, %c0_18] : memref<1x512xf32, #tpu.memory_space<vmem>>, vector<1x512xf32>
    tpu.vector_store %arg8[%c0_17, %c0_18], %20 {strides = array<i32>} : memref<1x512xf32, #tpu.memory_space<vmem>>, vector<1x512xf32>,
    return
  }
  func.func @transform_0(%arg0: i32) -> (i32, i32) {
    %c0_i32 = arith.constant 0 : i32
    %c0_i32_0 = arith.constant 0 : i32
    return %arg0, %c0_i32 : i32, i32
  }
  func.func @transform_1(%arg0: i32) -> (i32, i32) {
    %c0_i32 = arith.constant 0 : i32
    %c0_i32_0 = arith.constant 0 : i32
    %c0_i32_1 = arith.constant 0 : i32
    return %c0_i32, %c0_i32_0 : i32, i32
  }
  func.func @transform_2(%arg0: i32) -> (i32, i32) {
    %c0_i32 = arith.constant 0 : i32
    %c0_i32_0 = arith.constant 0 : i32
    %c0_i32_1 = arith.constant 0 : i32
    return %c0_i32, %c0_i32_0 : i32, i32
  }
  func.func @transform_3(%arg0: i32) -> (i32, i32) {
    %c0_i32 = arith.constant 0 : i32
    %c0_i32_0 = arith.constant 0 : i32
    %c0_i32_1 = arith.constant 0 : i32
    return %c0_i32, %c0_i32_0 : i32, i32
  }
  func.func @transform_4(%arg0: i32) -> (i32, i32) {
    %c0_i32 = arith.constant 0 : i32
    %c0_i32_0 = arith.constant 0 : i32
    %c0_i32_1 = arith.constant 0 : i32
    return %c0_i32, %c0_i32_0 : i32, i32
  }
  func.func @transform_5(%arg0: i32) -> (i32, i32) {
    %c0_i32 = arith.constant 0 : i32
    %c0_i32_0 = arith.constant 0 : i32
    %c0_i32_1 = arith.constant 0 : i32
    return %c0_i32, %c0_i32_0 : i32, i32
  }
  func.func @transform_6(%arg0: i32) -> (i32, i32) {
    %c0_i32 = arith.constant 0 : i32
    %c0_i32_0 = arith.constant 0 : i32
    %c0_i32_1 = arith.constant 0 : i32
    return %c0_i32, %c0_i32_0 : i32, i32
  }
  func.func @transform_7(%arg0: i32) -> (i32, i32) {
    %c0_i32 = arith.constant 0 : i32
    %c0_i32_0 = arith.constant 0 : i32
    return %c0_i32, %arg0 : i32, i32
  }
}

</mosaic_0001>

<llo_original>
// kernel: tpu_custom_call.1
$region0: #{tpu_custom_call.1}
  #allocation0 [shape = 'u32[]', space=smem, size = 0x4, offset = 0x4, fixed_abs, tag = 'smem constant byte address 0x4 - core index']
  #allocation1 [shape = 'u32[144,128]{1,0:T(1,128)}', space=vmem, size = 0x12000, scoped, tag = 'internal scratch']
  #allocation2 [shape = 'f32[1,1]{1,0:T(1,128)S(1)}', space=vmem, size = 0x200, scoped, tag = 'scoped memory for tpu_custom_call.1']
  %s0 = inlined_call_operand.vmem [shape: bf16[1024,16], index: 0, kind: input, shape index: {}]
  %s1 = inlined_call_operand.vmem [shape: f32[32,16], index: 1, kind: input, shape index: {}]
  %s2 = inlined_call_operand.vmem [shape: f32[32,1], index: 2, kind: input, shape index: {}]
  %s3 = inlined_call_operand.vmem [shape: f32[32,32], index: 3, kind: input, shape index: {}]
  %s4 = inlined_call_operand.vmem [shape: f32[32,1], index: 4, kind: input, shape index: {}]
  %s5 = inlined_call_operand.vmem [shape: f32[1,32], index: 5, kind: input, shape index: {}]
  %s6 = inlined_call_operand.<no memory space> [shape: f32[1,1], index: 6, kind: input, shape index: {}]
  %s7 = inlined_call_operand.hbm [shape: f32[1,1024], index: 7, kind: output, shape index: {}]
  %s8 = sld [smem:[#allocation0]]
  $region61: #{tpu_custom_call.1} parent=0
    _
  %s10 = ssub.s32 1, %s8
  %s11 = scalar_select 0, %s10, %s8
  %v12 = vstv %s6
  %13 = vst [vmem:[#allocation2] sm:$0x1] %v12
  $region1: #{tpu_custom_call.1} parent=0
    #allocation3 [shape = 'u8[4096]{0}', space=vmem, size = 0x1000, scoped, tag = 'output window, operand 0']
    #allocation4 [shape = 's32[2]{0}', space=sflag, size = 0x8, scoped, tag = 'scoped memory for tpu_custom_call.1']
    %14 = vsyncpa [#allocation4], 0
    %s15 = scalar_lea.sflag [#allocation4], 1
    %16 = vsyncpa %s15, 0
    loop: start=0, step=1, limit=4
    $region2: #{tpu_custom_call.1} parent=1 // loop_pre_header
      _
    $region3: #{tpu_custom_call.1} parent=1 // loop_header
      %s18 = sphi 0, %s22
      %p19 = scmp.ge.s32.totalorder %s18, 4
      %s28 = sphi 0, %s30
      %s31 = sphi 0, %s28
      %s32 = sphi 0, %s31
      %s48 = sphi 0, %s32
      %s52 = sphi 0, %s52
      %s54 = sphi 0, %s52
      %s55 = sphi 0, %s54
      %s69 = sphi 0, %s55
      %s73 = sphi 0, %s73
      %s75 = sphi 0, %s73
      %s76 = sphi 0, %s75
      %s90 = sphi 0, %s76
      %s94 = sphi 0, %s94
      %s96 = sphi 0, %s94
      %s97 = sphi 0, %s96
      %s111 = sphi 0, %s97
      %s115 = sphi 0, %s115
      %s117 = sphi 0, %s115
      %s118 = sphi 0, %s117
      %s132 = sphi 0, %s118
      %s136 = sphi 0, %s136
      %s138 = sphi 0, %s136
      %s139 = sphi 0, %s138
      %s153 = sphi 0, %s139
      %s157 = sphi 0, %s157
      %s159 = sphi 0, %s157
      %s160 = sphi 0, %s159
      %s174 = sphi 0, %s160
      %s180 = sphi 0, %s182
      %s183 = sphi 0, %s180
      %s184 = sphi 0, %s183
      %s200 = sphi 0, %s184
    $region4: #{tpu_custom_call.1} parent=1 // loop_header_branch
      %21 = sbr.rel (%p19) target = $region8
    $region5: #{tpu_custom_call.1} parent=1 // loop_body
      %s23 = ssub.s32 %s18, 1
      %s24 = ssub.s32 %s18, 2
      %s25 = sadd.s32 %s18, 1
      %s26 = ssub.s32 %s18, %s25
      %p27 = scmp.eq.s32.totalorder %s26, 0
      %s29 = sadd.s32 %s28, 1
      %s30 = scalar_select %p27, %s28, %s29
      %p33 = pneg %p27
      %p34 = scmp.eq.s32.totalorder %s18, 1
      %p35 = por %p33, %p34
      %p36 = scmp.ne.s32.totalorder %s28, %s31
      %p37 = scmp.eq.s32.totalorder %s18, 0
      %p38 = por %p36, %p37
      %p39 = scmp.ne.s32.totalorder %s28, %s31
      %p40 = scmp.eq.s32.totalorder %s23, 1
      %p41 = por %p39, %p40
      %p42 = scmp.ne.s32.totalorder %s31, %s32
      %p43 = scmp.eq.s32.totalorder %s23, 0
      %p44 = por %p42, %p43
      %p45 = scmp.ne.s32.totalorder %s31, %s32
      %p46 = scmp.eq.s32.totalorder %s24, 1
      %p47 = por %p45, %p46
      %p49 = scmp.ne.s32.totalorder %s32, %s48
      %p50 = scmp.eq.s32.totalorder %s24, 0
      %p51 = por %p49, %p50
      %s53 = sadd.s32 %s52, 1
      %p56 = scmp.eq.s32.totalorder %s18, 1
      %p57 = scmp.ne.s32.totalorder %s52, %s54
      %p58 = scmp.eq.s32.totalorder %s18, 0
      %p59 = por %p57, %p58
      %p60 = scmp.ne.s32.totalorder %s52, %s54
      %p61 = scmp.eq.s32.totalorder %s23, 1
      %p62 = por %p60, %p61
      %p63 = scmp.ne.s32.totalorder %s54, %s55
      %p64 = scmp.eq.s32.totalorder %s23, 0
      %p65 = por %p63, %p64
      %p66 = scmp.ne.s32.totalorder %s54, %s55
      %p67 = scmp.eq.s32.totalorder %s24, 1
      %p68 = por %p66, %p67
      %p70 = scmp.ne.s32.totalorder %s55, %s69
      %p71 = scmp.eq.s32.totalorder %s24, 0
      %p72 = por %p70, %p71
      %s74 = sadd.s32 %s73, 1
      %p77 = scmp.eq.s32.totalorder %s18, 1
      %p78 = scmp.ne.s32.totalorder %s73, %s75
      %p79 = scmp.eq.s32.totalorder %s18, 0
      %p80 = por %p78, %p79
      %p81 = scmp.ne.s32.totalorder %s73, %s75
      %p82 = scmp.eq.s32.totalorder %s23, 1
      %p83 = por %p81, %p82
      %p84 = scmp.ne.s32.totalorder %s75, %s76
      %p85 = scmp.eq.s32.totalorder %s23, 0
      %p86 = por %p84, %p85
      %p87 = scmp.ne.s32.totalorder %s75, %s76
      %p88 = scmp.eq.s32.totalorder %s24, 1
      %p89 = por %p87, %p88
      %p91 = scmp.ne.s32.totalorder %s76, %s90
      %p92 = scmp.eq.s32.totalorder %s24, 0
      %p93 = por %p91, %p92
      %s95 = sadd.s32 %s94, 1
      %p98 = scmp.eq.s32.totalorder %s18, 1
      %p99 = scmp.ne.s32.totalorder %s94, %s96
      %p100 = scmp.eq.s32.totalorder %s18, 0
      %p101 = por %p99, %p100
      %p102 = scmp.ne.s32.totalorder %s94, %s96
      %p103 = scmp.eq.s32.totalorder %s23, 1
      %p104 = por %p102, %p103
      %p105 = scmp.ne.s32.totalorder %s96, %s97
      %p106 = scmp.eq.s32.totalorder %s23, 0
      %p107 = por %p105, %p106
      %p108 = scmp.ne.s32.totalorder %s96, %s97
      %p109 = scmp.eq.s32.totalorder %s24, 1
      %p110 = por %p108, %p109
      %p112 = scmp.ne.s32.totalorder %s97, %s111
      %p113 = scmp.eq.s32.totalorder %s24, 0
      %p114 = por %p112, %p113
      %s116 = sadd.s32 %s115, 1
      %p119 = scmp.eq.s32.totalorder %s18, 1
      %p120 = scmp.ne.s32.totalorder %s115, %s117
      %p121 = scmp.eq.s32.totalorder %s18, 0
      %p122 = por %p120, %p121
      %p123 = scmp.ne.s32.totalorder %s115, %s117
      %p124 = scmp.eq.s32.totalorder %s23, 1
      %p125 = por %p123, %p124
      %p126 = scmp.ne.s32.totalorder %s117, %s118
      %p127 = scmp.eq.s32.totalorder %s23, 0
      %p128 = por %p126, %p127
      %p129 = scmp.ne.s32.totalorder %s117, %s118
      %p130 = scmp.eq.s32.totalorder %s24, 1
      %p131 = por %p129, %p130
      %p133 = scmp.ne.s32.totalorder %s118, %s132
      %p134 = scmp.eq.s32.totalorder %s24, 0
      %p135 = por %p133, %p134
      %s137 = sadd.s32 %s136, 1
      %p140 = scmp.eq.s32.totalorder %s18, 1
      %p141 = scmp.ne.s32.totalorder %s136, %s138
      %p142 = scmp.eq.s32.totalorder %s18, 0
      %p143 = por %p141, %p142
      %p144 = scmp.ne.s32.totalorder %s136, %s138
      %p145 = scmp.eq.s32.totalorder %s23, 1
      %p146 = por %p144, %p145
      %p147 = scmp.ne.s32.totalorder %s138, %s139
      %p148 = scmp.eq.s32.totalorder %s23, 0
      %p149 = por %p147, %p148
      %p150 = scmp.ne.s32.totalorder %s138, %s139
      %p151 = scmp.eq.s32.totalorder %s24, 1
      %p152 = por %p150, %p151
      %p154 = scmp.ne.s32.totalorder %s139, %s153
      %p155 = scmp.eq.s32.totalorder %s24, 0
      %p156 = por %p154, %p155
      %s158 = sadd.s32 %s157, 1
      %p161 = scmp.eq.s32.totalorder %s18, 1
      %p162 = scmp.ne.s32.totalorder %s157, %s159
      %p163 = scmp.eq.s32.totalorder %s18, 0
      %p164 = por %p162, %p163
      %p165 = scmp.ne.s32.totalorder %s157, %s159
      %p166 = scmp.eq.s32.totalorder %s23, 1
      %p167 = por %p165, %p166
      %p168 = scmp.ne.s32.totalorder %s159, %s160
      %p169 = scmp.eq.s32.totalorder %s23, 0
      %p170 = por %p168, %p169
      %p171 = scmp.ne.s32.totalorder %s159, %s160
      %p172 = scmp.eq.s32.totalorder %s24, 1
      %p173 = por %p171, %p172
      %p175 = scmp.ne.s32.totalorder %s160, %s174
      %p176 = scmp.eq.s32.totalorder %s24, 0
      %p177 = por %p175, %p176
      %s178 = ssub.s32 %s18, %s25
      %p179 = scmp.eq.s32.totalorder %s178, 0
      %s181 = sadd.s32 %s180, 1
      %s182 = scalar_select %p179, %s180, %s181
      %p185 = pneg %p179
      %p186 = scmp.eq.s32.totalorder %s18, 1
      %p187 = por %p185, %p186
      %p188 = scmp.ne.s32.totalorder %s180, %s183
      %p189 = scmp.eq.s32.totalorder %s18, 0
      %p190 = por %p188, %p189
      %p191 = scmp.ne.s32.totalorder %s180, %s183
      %p192 = scmp.eq.s32.totalorder %s23, 1
      %p193 = por %p191, %p192
      %p194 = scmp.ne.s32.totalorder %s183, %s184
      %p195 = scmp.eq.s32.totalorder %s23, 0
      %p196 = por %p194, %p195
      %p197 = scmp.ne.s32.totalorder %s183, %s184
      %p198 = scmp.eq.s32.totalorder %s24, 1
      %p199 = por %p197, %p198
      %p201 = scmp.ne.s32.totalorder %s184, %s200
      %p202 = scmp.eq.s32.totalorder %s24, 0
      %p203 = por %p201, %p202
      %p204 = scmp.le.s32.totalorder 1, %s18
      %p205 = scmp.lt.s32.totalorder %s18, 3
      %p206 = pnand %p204, %p205
      %p207 = pneg %p206
      // Predicated region
      $region9: #{tpu_custom_call.1} parent=5 // pred_check
        _
      $region10: #{tpu_custom_call.1} parent=5 // pred_check_branch
        %209 = sbr.rel (%p206) target = $region12
      $region11: #{tpu_custom_call.1} parent=5 // pred_region
        %s210 = ssub.s32 %s18, 1
        // Predicated region
        $region13: #{tpu_custom_call.1} parent=11 // pred_check
          %p211 = pneg %p65
        $region14: #{tpu_custom_call.1} parent=11 // pred_check_branch
          %213 = sbr.rel (%p211) target = $region16
        $region15: #{tpu_custom_call.1} parent=11 // pred_region
          _
        $region16: #{tpu_custom_call.1} parent=11 // pred_fallthru
          _
        // Predicated region
        $region17: #{tpu_custom_call.1} parent=11 // pred_check
          %p214 = pneg %p86
        $region18: #{tpu_custom_call.1} parent=11 // pred_check_branch
          %216 = sbr.rel (%p214) target = $region20
        $region19: #{tpu_custom_call.1} parent=11 // pred_region
          _
        $region20: #{tpu_custom_call.1} parent=11 // pred_fallthru
          _
        // Predicated region
        $region21: #{tpu_custom_call.1} parent=11 // pred_check
          %p217 = pneg %p107
        $region22: #{tpu_custom_call.1} parent=11 // pred_check_branch
          %219 = sbr.rel (%p217) target = $region24
        $region23: #{tpu_custom_call.1} parent=11 // pred_region
          _
        $region24: #{tpu_custom_call.1} parent=11 // pred_fallthru
          _
        // Predicated region
        $region25: #{tpu_custom_call.1} parent=11 // pred_check
          %p220 = pneg %p128
        $region26: #{tpu_custom_call.1} parent=11 // pred_check_branch
          %222 = sbr.rel (%p220) target = $region28
        $region27: #{tpu_custom_call.1} parent=11 // pred_region
          _
        $region28: #{tpu_custom_call.1} parent=11 // pred_fallthru
          _
        // Predicated region
        $region29: #{tpu_custom_call.1} parent=11 // pred_check
          %p223 = pneg %p149
        $region30: #{tpu_custom_call.1} parent=11 // pred_check_branch
          %225 = sbr.rel (%p223) target = $region32
        $region31: #{tpu_custom_call.1} parent=11 // pred_region
          _
        $region32: #{tpu_custom_call.1} parent=11 // pred_fallthru
          _
        // Predicated region
        $region33: #{tpu_custom_call.1} parent=11 // pred_check
          %p226 = pneg %p170
        $region34: #{tpu_custom_call.1} parent=11 // pred_check_branch
          %228 = sbr.rel (%p226) target = $region36
        $region35: #{tpu_custom_call.1} parent=11 // pred_region
          _
        $region36: #{tpu_custom_call.1} parent=11 // pred_fallthru
          _
      $region12: #{tpu_custom_call.1} parent=5 // pred_fallthru
        _
      %p229 = scmp.lt.s32.totalorder %s18, 2
      // Predicated region
      $region37: #{tpu_custom_call.1} parent=5 // pred_check
        %p230 = pneg %p229
      $region38: #{tpu_custom_call.1} parent=5 // pred_check_branch
        %232 = sbr.rel (%p230) target = $region40
      $region39: #{tpu_custom_call.1} parent=5 // pred_region
        // Predicated region
        $region41: #{tpu_custom_call.1} parent=39 // pred_check
          %p233 = pneg %p38
        $region42: #{tpu_custom_call.1} parent=39 // pred_check_branch
          %235 = sbr.rel (%p233) target = $region44
        $region43: #{tpu_custom_call.1} parent=39 // pred_region
          %s236 = smul.u32 64, %s18
          %p237 = scmp.lt.s32.totalorder %s236, 127
          %s238 = scalar_select %p237, %s236, 127
          %s239 = smul.addr %s238, 4
          %s240 = scalar_lea.vmem %s0, %s239
          %s241 = smul.u32 64, %s18
        $region44: #{tpu_custom_call.1} parent=39 // pred_fallthru
          _
      $region40: #{tpu_custom_call.1} parent=5 // pred_fallthru
        _
      %p242 = scmp.le.s32.totalorder 1, %s18
      %p243 = scmp.lt.s32.totalorder %s18, 3
      %p244 = pnand %p242, %p243
      %p245 = pneg %p244
      // Predicated region
      $region45: #{tpu_custom_call.1} parent=5 // pred_check
        _
      $region46: #{tpu_custom_call.1} parent=5 // pred_check_branch
        %247 = sbr.rel (%p244) target = $region48
      $region47: #{tpu_custom_call.1} parent=5 // pred_region
        %s248 = ssub.s32 %s18, 1
        %s249 = smul.u32 64, %s23
        %p250 = scmp.lt.s32.totalorder %s249, 127
        %s251 = scalar_select %p250, %s249, 127
        %s252 = smul.addr %s251, 4
        %s253 = scalar_lea.vmem %s0, %s252
        %p254 = pneg %p44
        %p255 = pneg %p41
        %p256 = pneg %p65
        %p257 = pneg %p62
        %p258 = pneg %p86
        %p259 = pneg %p83
        %p260 = pneg %p107
        %p261 = pneg %p104
        %p262 = pneg %p128
        %p263 = pneg %p125
        %p264 = pneg %p149
        %p265 = pneg %p146
        %p266 = pneg %p170
        %p267 = pneg %p167
        %p268 = pneg %p196
        %p269 = pneg %p193
        %s270 = sand.u32 %s183, 1
        %s271 = scalar_lea.sflag [#allocation4], %s270
        %s272 = sand.u32 %s183, 1
        %s273 = smul.addr %s272, 4
        %s274 = scalar_lea.vmem [#allocation3], %s273
        %s275 = smul.u32 64, %s23
        %p276 = scmp.lt.s32.totalorder %s275, 127
        %s277 = scalar_select %p276, %s275, 127
        %s278 = smul.addr %s277, 4
        %s279 = scalar_lea.vmem %s0, %s278
        %s280 = smul.u32 64, %s23
        %s281 = smul.u32 4, %s23
        %v282 = vld [vmem:[%s279] sm:$0xf]
        %v283 = vld [vmem:[%s279 + $0x4] sm:$0xf]
        %v284 = vld [vmem:[%s279 + $0x8] sm:$0xf]
        %v285 = vld [vmem:[%s279 + $0xc] sm:$0xf]
        %v286 = vld [vmem:[%s279 + $0x10] sm:$0xf]
        %v287 = vld [vmem:[%s279 + $0x14] sm:$0xf]
        %v288 = vld [vmem:[%s279 + $0x18] sm:$0xf]
        %v289 = vld [vmem:[%s279 + $0x1c] sm:$0xf]
        %v290 = vld [vmem:[%s279 + $0x20] sm:$0xf]
        %v291 = vld [vmem:[%s279 + $0x24] sm:$0xf]
        %v292 = vld [vmem:[%s279 + $0x28] sm:$0xf]
        %v293 = vld [vmem:[%s279 + $0x2c] sm:$0xf]
        %v294 = vld [vmem:[%s279 + $0x30] sm:$0xf]
        %v295 = vld [vmem:[%s279 + $0x34] sm:$0xf]
        %v296 = vld [vmem:[%s279 + $0x38] sm:$0xf]
        %v297 = vld [vmem:[%s279 + $0x3c] sm:$0xf]
        %v298 = vld [vmem:[%s279 + $0x40] sm:$0xf]
        %v299 = vld [vmem:[%s279 + $0x44] sm:$0xf]
        %v300 = vld [vmem:[%s279 + $0x48] sm:$0xf]
        %v301 = vld [vmem:[%s279 + $0x4c] sm:$0xf]
        %v302 = vld [vmem:[%s279 + $0x50] sm:$0xf]
        %v303 = vld [vmem:[%s279 + $0x54] sm:$0xf]
        %v304 = vld [vmem:[%s279 + $0x58] sm:$0xf]
        %v305 = vld [vmem:[%s279 + $0x5c] sm:$0xf]
        %v306 = vld [vmem:[%s279 + $0x60] sm:$0xf]
        %v307 = vld [vmem:[%s279 + $0x64] sm:$0xf]
        %v308 = vld [vmem:[%s279 + $0x68] sm:$0xf]
        %v309 = vld [vmem:[%s279 + $0x6c] sm:$0xf]
        %v310 = vld [vmem:[%s279 + $0x70] sm:$0xf]
        %v311 = vld [vmem:[%s279 + $0x74] sm:$0xf]
        %v312 = vld [vmem:[%s279 + $0x78] sm:$0xf]
        %v313 = vld [vmem:[%s279 + $0x7c] sm:$0xf]
        %v314 = vld [vmem:[%s279 + $0x80] sm:$0xf]
        %v315 = vld [vmem:[%s279 + $0x84] sm:$0xf]
        %v316 = vld [vmem:[%s279 + $0x88] sm:$0xf]
        %v317 = vld [vmem:[%s279 + $0x8c] sm:$0xf]
        %v318 = vld [vmem:[%s279 + $0x90] sm:$0xf]
        %v319 = vld [vmem:[%s279 + $0x94] sm:$0xf]
        %v320 = vld [vmem:[%s279 + $0x98] sm:$0xf]
        %v321 = vld [vmem:[%s279 + $0x9c] sm:$0xf]
        %v322 = vld [vmem:[%s279 + $0xa0] sm:$0xf]
        %v323 = vld [vmem:[%s279 + $0xa4] sm:$0xf]
        %v324 = vld [vmem:[%s279 + $0xa8] sm:$0xf]
        %v325 = vld [vmem:[%s279 + $0xac] sm:$0xf]
        %v326 = vld [vmem:[%s279 + $0xb0] sm:$0xf]
        %v327 = vld [vmem:[%s279 + $0xb4] sm:$0xf]
        %v328 = vld [vmem:[%s279 + $0xb8] sm:$0xf]
        %v329 = vld [vmem:[%s279 + $0xbc] sm:$0xf]
        %v330 = vld [vmem:[%s279 + $0xc0] sm:$0xf]
        %v331 = vld [vmem:[%s279 + $0xc4] sm:$0xf]
        %v332 = vld [vmem:[%s279 + $0xc8] sm:$0xf]
        %v333 = vld [vmem:[%s279 + $0xcc] sm:$0xf]
        %v334 = vld [vmem:[%s279 + $0xd0] sm:$0xf]
        %v335 = vld [vmem:[%s279 + $0xd4] sm:$0xf]
        %v336 = vld [vmem:[%s279 + $0xd8] sm:$0xf]
        %v337 = vld [vmem:[%s279 + $0xdc] sm:$0xf]
        %v338 = vld [vmem:[%s279 + $0xe0] sm:$0xf]
        %v339 = vld [vmem:[%s279 + $0xe4] sm:$0xf]
        %v340 = vld [vmem:[%s279 + $0xe8] sm:$0xf]
        %v341 = vld [vmem:[%s279 + $0xec] sm:$0xf]
        %v342 = vld [vmem:[%s279 + $0xf0] sm:$0xf]
        %v343 = vld [vmem:[%s279 + $0xf4] sm:$0xf]
        %v344 = vld [vmem:[%s279 + $0xf8] sm:$0xf]
        %v345 = vld [vmem:[%s279 + $0xfc] sm:$0xf]
        %v346 = vunpack.c.l.bf16 %v282
        %v347 = vunpack.c.l.bf16 %v283
        %v348 = vunpack.c.l.bf16 %v284
        %v349 = vunpack.c.l.bf16 %v285
        %v350 = vunpack.c.l.bf16 %v286
        %v351 = vunpack.c.l.bf16 %v287
        %v352 = vunpack.c.l.bf16 %v288
        %v353 = vunpack.c.l.bf16 %v289
        %v354 = vunpack.c.l.bf16 %v290
        %v355 = vunpack.c.l.bf16 %v291
        %v356 = vunpack.c.l.bf16 %v292
        %v357 = vunpack.c.l.bf16 %v293
        %v358 = vunpack.c.l.bf16 %v294
        %v359 = vunpack.c.l.bf16 %v295
        %v360 = vunpack.c.l.bf16 %v296
        %v361 = vunpack.c.l.bf16 %v297
        %v362 = vunpack.c.l.bf16 %v298
        %v363 = vunpack.c.l.bf16 %v299
        %v364 = vunpack.c.l.bf16 %v300
        %v365 = vunpack.c.l.bf16 %v301
        %v366 = vunpack.c.l.bf16 %v302
        %v367 = vunpack.c.l.bf16 %v303
        %v368 = vunpack.c.l.bf16 %v304
        %v369 = vunpack.c.l.bf16 %v305
        %v370 = vunpack.c.l.bf16 %v306
        %v371 = vunpack.c.l.bf16 %v307
        %v372 = vunpack.c.l.bf16 %v308
        %v373 = vunpack.c.l.bf16 %v309
        %v374 = vunpack.c.l.bf16 %v310
        %v375 = vunpack.c.l.bf16 %v311
        %v376 = vunpack.c.l.bf16 %v312
        %v377 = vunpack.c.l.bf16 %v313
        %v378 = vunpack.c.l.bf16 %v314
        %v379 = vunpack.c.l.bf16 %v315
        %v380 = vunpack.c.l.bf16 %v316
        %v381 = vunpack.c.l.bf16 %v317
        %v382 = vunpack.c.l.bf16 %v318
        %v383 = vunpack.c.l.bf16 %v319
        %v384 = vunpack.c.l.bf16 %v320
        %v385 = vunpack.c.l.bf16 %v321
        %v386 = vunpack.c.l.bf16 %v322
        %v387 = vunpack.c.l.bf16 %v323
        %v388 = vunpack.c.l.bf16 %v324
        %v389 = vunpack.c.l.bf16 %v325
        %v390 = vunpack.c.l.bf16 %v326
        %v391 = vunpack.c.l.bf16 %v327
        %v392 = vunpack.c.l.bf16 %v328
        %v393 = vunpack.c.l.bf16 %v329
        %v394 = vunpack.c.l.bf16 %v330
        %v395 = vunpack.c.l.bf16 %v331
        %v396 = vunpack.c.l.bf16 %v332
        %v397 = vunpack.c.l.bf16 %v333
        %v398 = vunpack.c.l.bf16 %v334
        %v399 = vunpack.c.l.bf16 %v335
        %v400 = vunpack.c.l.bf16 %v336
        %v401 = vunpack.c.l.bf16 %v337
        %v402 = vunpack.c.l.bf16 %v338
        %v403 = vunpack.c.l.bf16 %v339
        %v404 = vunpack.c.l.bf16 %v340
        %v405 = vunpack.c.l.bf16 %v341
        %v406 = vunpack.c.l.bf16 %v342
        %v407 = vunpack.c.l.bf16 %v343
        %v408 = vunpack.c.l.bf16 %v344
        %v409 = vunpack.c.l.bf16 %v345
        %v410 = vld [vmem:[%s1] sm:$0xff]
        %v411 = vld [vmem:[%s1 + $0x8] sm:$0xff]
        %v412 = vld [vmem:[%s1 + $0x10] sm:$0xff]
        %v413 = vld [vmem:[%s1 + $0x18] sm:$0xff]
        %v414 = vld [vmem:[%s2] sm:$0xff]
        %v415 = vld [vmem:[%s2 + $0x8] sm:$0xff]
        %v416 = vld [vmem:[%s2 + $0x10] sm:$0xff]
        %v417 = vld [vmem:[%s2 + $0x18] sm:$0xff]
        %419 = vset.pattern.permute.xlu0 0
        %420 = vperm.xlu0 %419, %v414
        %v421 = vpop.permute.xlu0 %420
        %424 = vset.pattern.permute.xlu0 0
        %425 = vperm.xlu0 %424, %v415
        %v426 = vpop.permute.xlu0 %425
        %429 = vset.pattern.permute.xlu0 0
        %430 = vperm.xlu0 %429, %v416
        %v431 = vpop.permute.xlu0 %430
        %434 = vset.pattern.permute.xlu0 0
        %435 = vperm.xlu0 %434, %v417
        %v436 = vpop.permute.xlu0 %435
        %vm438 = vcmask 130048
        %v440 = vsel %vm438, %v410, 0
        %v443 = vsel %vm438, %v411, 0
        %v446 = vsel %vm438, %v412, 0
        %v449 = vsel %vm438, %v413, 0
        %v452 = vsel %vm438, %v346, 0
        %v455 = vsel %vm438, %v347, 0
        %v458 = vsel %vm438, %v348, 0
        %v461 = vsel %vm438, %v349, 0
        %v464 = vsel %vm438, %v350, 0
        %v467 = vsel %vm438, %v351, 0
        %v470 = vsel %vm438, %v352, 0
        %v473 = vsel %vm438, %v353, 0
        %v476 = vsel %vm438, %v354, 0
        %v479 = vsel %vm438, %v355, 0
        %v482 = vsel %vm438, %v356, 0
        %v485 = vsel %vm438, %v357, 0
        %v488 = vsel %vm438, %v358, 0
        %v491 = vsel %vm438, %v359, 0
        %v494 = vsel %vm438, %v360, 0
        %v497 = vsel %vm438, %v361, 0
        %v500 = vsel %vm438, %v362, 0
        %v503 = vsel %vm438, %v363, 0
        %v506 = vsel %vm438, %v364, 0
        %v509 = vsel %vm438, %v365, 0
        %v512 = vsel %vm438, %v366, 0
        %v515 = vsel %vm438, %v367, 0
        %v518 = vsel %vm438, %v368, 0
        %v521 = vsel %vm438, %v369, 0
        %v524 = vsel %vm438, %v370, 0
        %v527 = vsel %vm438, %v371, 0
        %v530 = vsel %vm438, %v372, 0
        %v533 = vsel %vm438, %v373, 0
        %v536 = vsel %vm438, %v374, 0
        %v539 = vsel %vm438, %v375, 0
        %v542 = vsel %vm438, %v376, 0
        %v545 = vsel %vm438, %v377, 0
        %v548 = vsel %vm438, %v378, 0
        %v551 = vsel %vm438, %v379, 0
        %v554 = vsel %vm438, %v380, 0
        %v557 = vsel %vm438, %v381, 0
        %v560 = vsel %vm438, %v382, 0
        %v563 = vsel %vm438, %v383, 0
        %v566 = vsel %vm438, %v384, 0
        %v569 = vsel %vm438, %v385, 0
        %v572 = vsel %vm438, %v386, 0
        %v575 = vsel %vm438, %v387, 0
        %v578 = vsel %vm438, %v388, 0
        %v581 = vsel %vm438, %v389, 0
        %v584 = vsel %vm438, %v390, 0
        %v587 = vsel %vm438, %v391, 0
        %v590 = vsel %vm438, %v392, 0
        %v593 = vsel %vm438, %v393, 0
        %v596 = vsel %vm438, %v394, 0
        %v599 = vsel %vm438, %v395, 0
        %v602 = vsel %vm438, %v396, 0
        %v605 = vsel %vm438, %v397, 0
        %v608 = vsel %vm438, %v398, 0
        %v611 = vsel %vm438, %v399, 0
        %v614 = vsel %vm438, %v400, 0
        %v617 = vsel %vm438, %v401, 0
        %v620 = vsel %vm438, %v402, 0
        %v623 = vsel %vm438, %v403, 0
        %v626 = vsel %vm438, %v404, 0
        %v629 = vsel %vm438, %v405, 0
        %v632 = vsel %vm438, %v406, 0
        %v635 = vsel %vm438, %v407, 0
        %v638 = vsel %vm438, %v408, 0
        %v641 = vsel %vm438, %v409, 0
        %643 = vmatprep.subr.mxu0 0.0
        %644 = vmatpush1.xpose.msra.mxu0 %v497
        %645 = vmatprep.subr.mxu0 0.0
        %646 = vmatpush1.xpose.msra.mxu0 %v494
        %647 = vmatprep.subr.mxu0 0.0
        %648 = vmatpush1.xpose.msra.mxu0 %v491
        %649 = vmatprep.subr.mxu0 0.0
        %650 = vmatpush1.xpose.msra.mxu0 %v488
        %651 = vmatprep.subr.mxu0 0.0
        %652 = vmatpush1.xpose.msra.mxu0 %v485
        %653 = vmatprep.subr.mxu0 0.0
        %654 = vmatpush1.xpose.msra.mxu0 %v482
        %655 = vmatprep.subr.mxu0 0.0
        %656 = vmatpush1.xpose.msra.mxu0 %v479
        %657 = vmatprep.subr.mxu0 0.0
        %658 = vmatpush1.xpose.msra.mxu0 %v476
        %659 = vmatprep.subr.mxu0 0.0
        %660 = vmatpush1.xpose.msra.mxu0 %v473
        %661 = vmatprep.subr.mxu0 0.0
        %662 = vmatpush1.xpose.msra.mxu0 %v470
        %663 = vmatprep.subr.mxu0 0.0
        %664 = vmatpush1.xpose.msra.mxu0 %v467
        %665 = vmatprep.subr.mxu0 0.0
        %666 = vmatpush1.xpose.msra.mxu0 %v464
        %667 = vmatprep.subr.mxu0 0.0
        %668 = vmatpush1.xpose.msra.mxu0 %v461
        %669 = vmatprep.subr.mxu0 0.0
        %670 = vmatpush1.xpose.msra.mxu0 %v458
        %671 = vmatprep.subr.mxu0 0.0
        %672 = vmatpush1.xpose.msra.mxu0 %v455
        %673 = vmatprep.subr.mxu0 0.0
        %674 = vmatpush1.xpose.msra.mxu0 %v452
        %675 = vmatprep.subr.mxu0 0.0
        %676 = vmatpush2.xpose.msra.mxu0 %v545
        %677 = vmatprep.subr.mxu0 0.0
        %678 = vmatpush2.xpose.msra.mxu0 %v542
        %679 = vmatprep.subr.mxu0 0.0
        %680 = vmatpush2.xpose.msra.mxu0 %v539
        %681 = vmatprep.subr.mxu0 0.0
        %682 = vmatpush2.xpose.msra.mxu0 %v536
        %683 = vmatprep.subr.mxu0 0.0
        %684 = vmatpush2.xpose.msra.mxu0 %v533
        %685 = vmatprep.subr.mxu0 0.0
        %686 = vmatpush2.xpose.msra.mxu0 %v530
        %687 = vmatprep.subr.mxu0 0.0
        %688 = vmatpush2.xpose.msra.mxu0 %v527
        %689 = vmatprep.subr.mxu0 0.0
        %690 = vmatpush2.xpose.msra.mxu0 %v524
        %691 = vmatprep.subr.mxu0 0.0
        %692 = vmatpush2.xpose.msra.mxu0 %v521
        %693 = vmatprep.subr.mxu0 0.0
        %694 = vmatpush2.xpose.msra.mxu0 %v518
        %695 = vmatprep.subr.mxu0 0.0
        %696 = vmatpush2.xpose.msra.mxu0 %v515
        %697 = vmatprep.subr.mxu0 0.0
        %698 = vmatpush2.xpose.msra.mxu0 %v512
        %699 = vmatprep.subr.mxu0 0.0
        %700 = vmatpush2.xpose.msra.mxu0 %v509
        %701 = vmatprep.subr.mxu0 0.0
        %702 = vmatpush2.xpose.msra.mxu0 %v506
        %703 = vmatprep.subr.mxu0 0.0
        %704 = vmatpush2.xpose.msra.mxu0 %v503
        %705 = vmatprep.subr.mxu0 0.0
        %706 = vmatpush2.xpose.msra.mxu0 %v500
        %707 = vmatprep.mubr.f32.mxu0 0.0
        %708 = vmatmul.mubr.f32.gmra.mxu0 %v440
        %v709 = vpop.f32.mrf.mxu0
        %v710 = vadd.f32 %v421, %v709
        %v711 = vpop.f32.mrf.mxu0
        %v712 = vadd.f32 %v421, %v711
        %713 = vmatprep.mubr.f32.mxu0 0.0
        %714 = vmatmul.mubr.f32.gmra.mxu0 %v443
        %v715 = vpop.f32.mrf.mxu0
        %v716 = vadd.f32 %v426, %v715
        %v717 = vpop.f32.mrf.mxu0
        %v718 = vadd.f32 %v426, %v717
        %719 = vmatprep.mubr.f32.mxu0 0.0
        %720 = vmatmul.mubr.f32.gmra.mxu0 %v446
        %v721 = vpop.f32.mrf.mxu0
        %v722 = vadd.f32 %v431, %v721
        %v723 = vpop.f32.mrf.mxu0
        %v724 = vadd.f32 %v431, %v723
        %725 = vmatprep.mubr.f32.mxu0 0.0
        %726 = vmatmul.mubr.f32.gmra.mxu0 %v449
        %v727 = vpop.f32.mrf.mxu0
        %v728 = vadd.f32 %v436, %v727
        %v729 = vpop.f32.mrf.mxu0
        %v730 = vadd.f32 %v436, %v729
        %731 = vdwg.mxu0
        %732 = vmatprep.subr.mxu0 0.0
        %733 = vmatpush1.xpose.msra.mxu0 %v593
        %734 = vmatprep.subr.mxu0 0.0
        %735 = vmatpush1.xpose.msra.mxu0 %v590
        %736 = vmatprep.subr.mxu0 0.0
        %737 = vmatpush1.xpose.msra.mxu0 %v587
        %738 = vmatprep.subr.mxu0 0.0
        %739 = vmatpush1.xpose.msra.mxu0 %v584
        %740 = vmatprep.subr.mxu0 0.0
        %741 = vmatpush1.xpose.msra.mxu0 %v581
        %742 = vmatprep.subr.mxu0 0.0
        %743 = vmatpush1.xpose.msra.mxu0 %v578
        %744 = vmatprep.subr.mxu0 0.0
        %745 = vmatpush1.xpose.msra.mxu0 %v575
        %746 = vmatprep.subr.mxu0 0.0
        %747 = vmatpush1.xpose.msra.mxu0 %v572
        %748 = vmatprep.subr.mxu0 0.0
        %749 = vmatpush1.xpose.msra.mxu0 %v569
        %750 = vmatprep.subr.mxu0 0.0
        %751 = vmatpush1.xpose.msra.mxu0 %v566
        %752 = vmatprep.subr.mxu0 0.0
        %753 = vmatpush1.xpose.msra.mxu0 %v563
        %754 = vmatprep.subr.mxu0 0.0
        %755 = vmatpush1.xpose.msra.mxu0 %v560
        %756 = vmatprep.subr.mxu0 0.0
        %757 = vmatpush1.xpose.msra.mxu0 %v557
        %758 = vmatprep.subr.mxu0 0.0
        %759 = vmatpush1.xpose.msra.mxu0 %v554
        %760 = vmatprep.subr.mxu0 0.0
        %761 = vmatpush1.xpose.msra.mxu0 %v551
        %762 = vmatprep.subr.mxu0 0.0
        %763 = vmatpush1.xpose.msra.mxu0 %v548
        %764 = vmatprep.subr.mxu0 0.0
        %765 = vmatpush2.xpose.msra.mxu0 %v641
        %766 = vmatprep.subr.mxu0 0.0
        %767 = vmatpush2.xpose.msra.mxu0 %v638
        %768 = vmatprep.subr.mxu0 0.0
        %769 = vmatpush2.xpose.msra.mxu0 %v635
        %770 = vmatprep.subr.mxu0 0.0
        %771 = vmatpush2.xpose.msra.mxu0 %v632
        %772 = vmatprep.subr.mxu0 0.0
        %773 = vmatpush2.xpose.msra.mxu0 %v629
        %774 = vmatprep.subr.mxu0 0.0
        %775 = vmatpush2.xpose.msra.mxu0 %v626
        %776 = vmatprep.subr.mxu0 0.0
        %777 = vmatpush2.xpose.msra.mxu0 %v623
        %778 = vmatprep.subr.mxu0 0.0
        %779 = vmatpush2.xpose.msra.mxu0 %v620
        %780 = vmatprep.subr.mxu0 0.0
        %781 = vmatpush2.xpose.msra.mxu0 %v617
        %782 = vmatprep.subr.mxu0 0.0
        %783 = vmatpush2.xpose.msra.mxu0 %v614
        %784 = vmatprep.subr.mxu0 0.0
        %785 = vmatpush2.xpose.msra.mxu0 %v611
        %786 = vmatprep.subr.mxu0 0.0
        %787 = vmatpush2.xpose.msra.mxu0 %v608
        %788 = vmatprep.subr.mxu0 0.0
        %789 = vmatpush2.xpose.msra.mxu0 %v605
        %790 = vmatprep.subr.mxu0 0.0
        %791 = vmatpush2.xpose.msra.mxu0 %v602
        %792 = vmatprep.subr.mxu0 0.0
        %793 = vmatpush2.xpose.msra.mxu0 %v599
        %794 = vmatprep.subr.mxu0 0.0
        %795 = vmatpush2.xpose.msra.mxu0 %v596
        %796 = vmatprep.mubr.f32.mxu0 0.0
        %797 = vmatmul.mubr.f32.gmra.mxu0 %v440
        %v798 = vpop.f32.mrf.mxu0
        %v799 = vadd.f32 %v421, %v798
        %v800 = vpop.f32.mrf.mxu0
        %v801 = vadd.f32 %v421, %v800
        %802 = vmatprep.mubr.f32.mxu0 0.0
        %803 = vmatmul.mubr.f32.gmra.mxu0 %v443
        %v804 = vpop.f32.mrf.mxu0
        %v805 = vadd.f32 %v426, %v804
        %v806 = vpop.f32.mrf.mxu0
        %v807 = vadd.f32 %v426, %v806
        %808 = vmatprep.mubr.f32.mxu0 0.0
        %809 = vmatmul.mubr.f32.gmra.mxu0 %v446
        %v810 = vpop.f32.mrf.mxu0
        %v811 = vadd.f32 %v431, %v810
        %v812 = vpop.f32.mrf.mxu0
        %v813 = vadd.f32 %v431, %v812
        %814 = vmatprep.mubr.f32.mxu0 0.0
        %815 = vmatmul.mubr.f32.gmra.mxu0 %v449
        %v816 = vpop.f32.mrf.mxu0
        %v817 = vadd.f32 %v436, %v816
        %v818 = vpop.f32.mrf.mxu0
        %v819 = vadd.f32 %v436, %v818
        %820 = vdwg.mxu0
        %v821 = vmax.f32 %v710, 0.0
        %v822 = vmax.f32 %v712, 0.0
        %v823 = vmax.f32 %v799, 0.0
        %v824 = vmax.f32 %v801, 0.0
        %v825 = vmax.f32 %v716, 0.0
        %v826 = vmax.f32 %v718, 0.0
        %v827 = vmax.f32 %v805, 0.0
        %v828 = vmax.f32 %v807, 0.0
        %v829 = vmax.f32 %v722, 0.0
        %v830 = vmax.f32 %v724, 0.0
        %v831 = vmax.f32 %v811, 0.0
        %v832 = vmax.f32 %v813, 0.0
        %v833 = vmax.f32 %v728, 0.0
        %v834 = vmax.f32 %v730, 0.0
        %v835 = vmax.f32 %v817, 0.0
        %v836 = vmax.f32 %v819, 0.0
        %v837 = vld [vmem:[%s3] sm:$0xff]
        %v838 = vld [vmem:[%s3 + $0x8] sm:$0xff]
        %v839 = vld [vmem:[%s3 + $0x10] sm:$0xff]
        %v840 = vld [vmem:[%s3 + $0x18] sm:$0xff]
        %v841 = vld [vmem:[%s4] sm:$0xff]
        %v842 = vld [vmem:[%s4 + $0x8] sm:$0xff]
        %v843 = vld [vmem:[%s4 + $0x10] sm:$0xff]
        %v844 = vld [vmem:[%s4 + $0x18] sm:$0xff]
        %846 = vset.pattern.permute.xlu0 0
        %847 = vperm.xlu0 %846, %v841
        %v848 = vpop.permute.xlu0 %847
        %851 = vset.pattern.permute.xlu0 0
        %852 = vperm.xlu0 %851, %v842
        %v853 = vpop.permute.xlu0 %852
        %856 = vset.pattern.permute.xlu0 0
        %857 = vperm.xlu0 %856, %v843
        %v858 = vpop.permute.xlu0 %857
        %861 = vset.pattern.permute.xlu0 0
        %862 = vperm.xlu0 %861, %v844
        %v863 = vpop.permute.xlu0 %862
        %vm865 = vcmask 261120
        %v867 = vsel %vm865, %v837, 0
        %v870 = vsel %vm865, %v838, 0
        %v873 = vsel %vm865, %v839, 0
        %v876 = vsel %vm865, %v840, 0
        %878 = vmatprep.subr.mxu0 0.0
        %879 = vmatpush1.msra.mxu0 0.0
        %880 = vmatprep.subr.mxu0 0.0
        %881 = vmatpush1.msra.mxu0 0.0
        %882 = vmatprep.subr.mxu0 0.0
        %883 = vmatpush1.msra.mxu0 0.0
        %884 = vmatprep.subr.mxu0 0.0
        %885 = vmatpush1.msra.mxu0 0.0
        %886 = vmatprep.subr.mxu0 0.0
        %887 = vmatpush1.msra.mxu0 0.0
        %888 = vmatprep.subr.mxu0 0.0
        %889 = vmatpush1.msra.mxu0 0.0
        %890 = vmatprep.subr.mxu0 0.0
        %891 = vmatpush1.msra.mxu0 0.0
        %892 = vmatprep.subr.mxu0 0.0
        %893 = vmatpush1.msra.mxu0 0.0
        %894 = vmatprep.subr.mxu0 0.0
        %895 = vmatpush1.msra.mxu0 0.0
        %896 = vmatprep.subr.mxu0 0.0
        %897 = vmatpush1.msra.mxu0 0.0
        %898 = vmatprep.subr.mxu0 0.0
        %899 = vmatpush1.msra.mxu0 0.0
        %900 = vmatprep.subr.mxu0 0.0
        %901 = vmatpush1.msra.mxu0 0.0
        %902 = vmatprep.subr.mxu0 %v834
        %903 = vmatpush1.msra.mxu0 %v833
        %904 = vmatprep.subr.mxu0 %v830
        %905 = vmatpush1.msra.mxu0 %v829
        %906 = vmatprep.subr.mxu0 %v826
        %907 = vmatpush1.msra.mxu0 %v825
        %908 = vmatprep.subr.mxu0 %v822
        %909 = vmatpush1.msra.mxu0 %v821
        %910 = vmatprep.subr.mxu0 0.0
        %911 = vmatpush2.msra.mxu0 0.0
        %912 = vmatprep.subr.mxu0 0.0
        %913 = vmatpush2.msra.mxu0 0.0
        %914 = vmatprep.subr.mxu0 0.0
        %915 = vmatpush2.msra.mxu0 0.0
        %916 = vmatprep.subr.mxu0 0.0
        %917 = vmatpush2.msra.mxu0 0.0
        %918 = vmatprep.subr.mxu0 0.0
        %919 = vmatpush2.msra.mxu0 0.0
        %920 = vmatprep.subr.mxu0 0.0
        %921 = vmatpush2.msra.mxu0 0.0
        %922 = vmatprep.subr.mxu0 0.0
        %923 = vmatpush2.msra.mxu0 0.0
        %924 = vmatprep.subr.mxu0 0.0
        %925 = vmatpush2.msra.mxu0 0.0
        %926 = vmatprep.subr.mxu0 0.0
        %927 = vmatpush2.msra.mxu0 0.0
        %928 = vmatprep.subr.mxu0 0.0
        %929 = vmatpush2.msra.mxu0 0.0
        %930 = vmatprep.subr.mxu0 0.0
        %931 = vmatpush2.msra.mxu0 0.0
        %932 = vmatprep.subr.mxu0 0.0
        %933 = vmatpush2.msra.mxu0 0.0
        %934 = vmatprep.subr.mxu0 0.0
        %935 = vmatpush2.msra.mxu0 0.0
        %936 = vmatprep.subr.mxu0 0.0
        %937 = vmatpush2.msra.mxu0 0.0
        %938 = vmatprep.subr.mxu0 0.0
        %939 = vmatpush2.msra.mxu0 0.0
        %940 = vmatprep.subr.mxu0 0.0
        %941 = vmatpush2.msra.mxu0 0.0
        %942 = vmatprep.mubr.f32.mxu0 0.0
        %943 = vmatmul.mubr.f32.gmra.mxu0 %v867
        %v944 = vpop.f32.mrf.mxu0
        %v945 = vadd.f32 %v848, %v944
        %v946 = vpop.f32.mrf.mxu0
        %v947 = vadd.f32 %v848, %v946
        %948 = vmatprep.mubr.f32.mxu0 0.0
        %949 = vmatmul.mubr.f32.gmra.mxu0 %v870
        %v950 = vpop.f32.mrf.mxu0
        %v951 = vadd.f32 %v853, %v950
        %v952 = vpop.f32.mrf.mxu0
        %v953 = vadd.f32 %v853, %v952
        %954 = vmatprep.mubr.f32.mxu0 0.0
        %955 = vmatmul.mubr.f32.gmra.mxu0 %v873
        %v956 = vpop.f32.mrf.mxu0
        %v957 = vadd.f32 %v858, %v956
        %v958 = vpop.f32.mrf.mxu0
        %v959 = vadd.f32 %v858, %v958
        %960 = vmatprep.mubr.f32.mxu0 0.0
        %961 = vmatmul.mubr.f32.gmra.mxu0 %v876
        %v962 = vpop.f32.mrf.mxu0
        %v963 = vadd.f32 %v863, %v962
        %v964 = vpop.f32.mrf.mxu0
        %v965 = vadd.f32 %v863, %v964
        %966 = vdwg.mxu0
        %967 = vmatprep.subr.mxu0 0.0
        %968 = vmatpush1.msra.mxu0 0.0
        %969 = vmatprep.subr.mxu0 0.0
        %970 = vmatpush1.msra.mxu0 0.0
        %971 = vmatprep.subr.mxu0 0.0
        %972 = vmatpush1.msra.mxu0 0.0
        %973 = vmatprep.subr.mxu0 0.0
        %974 = vmatpush1.msra.mxu0 0.0
        %975 = vmatprep.subr.mxu0 0.0
        %976 = vmatpush1.msra.mxu0 0.0
        %977 = vmatprep.subr.mxu0 0.0
        %978 = vmatpush1.msra.mxu0 0.0
        %979 = vmatprep.subr.mxu0 0.0
        %980 = vmatpush1.msra.mxu0 0.0
        %981 = vmatprep.subr.mxu0 0.0
        %982 = vmatpush1.msra.mxu0 0.0
        %983 = vmatprep.subr.mxu0 0.0
        %984 = vmatpush1.msra.mxu0 0.0
        %985 = vmatprep.subr.mxu0 0.0
        %986 = vmatpush1.msra.mxu0 0.0
        %987 = vmatprep.subr.mxu0 0.0
        %988 = vmatpush1.msra.mxu0 0.0
        %989 = vmatprep.subr.mxu0 0.0
        %990 = vmatpush1.msra.mxu0 0.0
        %991 = vmatprep.subr.mxu0 %v836
        %992 = vmatpush1.msra.mxu0 %v835
        %993 = vmatprep.subr.mxu0 %v832
        %994 = vmatpush1.msra.mxu0 %v831
        %995 = vmatprep.subr.mxu0 %v828
        %996 = vmatpush1.msra.mxu0 %v827
        %997 = vmatprep.subr.mxu0 %v824
        %998 = vmatpush1.msra.mxu0 %v823
        %999 = vmatprep.subr.mxu0 0.0
        %1000 = vmatpush2.msra.mxu0 0.0
        %1001 = vmatprep.subr.mxu0 0.0
        %1002 = vmatpush2.msra.mxu0 0.0
        %1003 = vmatprep.subr.mxu0 0.0
        %1004 = vmatpush2.msra.mxu0 0.0
        %1005 = vmatprep.subr.mxu0 0.0
        %1006 = vmatpush2.msra.mxu0 0.0
        %1007 = vmatprep.subr.mxu0 0.0
        %1008 = vmatpush2.msra.mxu0 0.0
        %1009 = vmatprep.subr.mxu0 0.0
        %1010 = vmatpush2.msra.mxu0 0.0
        %1011 = vmatprep.subr.mxu0 0.0
        %1012 = vmatpush2.msra.mxu0 0.0
        %1013 = vmatprep.subr.mxu0 0.0
        %1014 = vmatpush2.msra.mxu0 0.0
        %1015 = vmatprep.subr.mxu0 0.0
        %1016 = vmatpush2.msra.mxu0 0.0
        %1017 = vmatprep.subr.mxu0 0.0
        %1018 = vmatpush2.msra.mxu0 0.0
        %1019 = vmatprep.subr.mxu0 0.0
        %1020 = vmatpush2.msra.mxu0 0.0
        %1021 = vmatprep.subr.mxu0 0.0
        %1022 = vmatpush2.msra.mxu0 0.0
        %1023 = vmatprep.subr.mxu0 0.0
        %1024 = vmatpush2.msra.mxu0 0.0
        %1025 = vmatprep.subr.mxu0 0.0
        %1026 = vmatpush2.msra.mxu0 0.0
        %1027 = vmatprep.subr.mxu0 0.0
        %1028 = vmatpush2.msra.mxu0 0.0
        %1029 = vmatprep.subr.mxu0 0.0
        %1030 = vmatpush2.msra.mxu0 0.0
        %1031 = vmatprep.mubr.f32.mxu0 0.0
        %1032 = vmatmul.mubr.f32.gmra.mxu0 %v867
        %v1033 = vpop.f32.mrf.mxu0
        %v1034 = vadd.f32 %v848, %v1033
        %v1035 = vpop.f32.mrf.mxu0
        %v1036 = vadd.f32 %v848, %v1035
        %1037 = vmatprep.mubr.f32.mxu0 0.0
        %1038 = vmatmul.mubr.f32.gmra.mxu0 %v870
        %v1039 = vpop.f32.mrf.mxu0
        %v1040 = vadd.f32 %v853, %v1039
        %v1041 = vpop.f32.mrf.mxu0
        %v1042 = vadd.f32 %v853, %v1041
        %1043 = vmatprep.mubr.f32.mxu0 0.0
        %1044 = vmatmul.mubr.f32.gmra.mxu0 %v873
        %v1045 = vpop.f32.mrf.mxu0
        %v1046 = vadd.f32 %v858, %v1045
        %v1047 = vpop.f32.mrf.mxu0
        %v1048 = vadd.f32 %v858, %v1047
        %1049 = vmatprep.mubr.f32.mxu0 0.0
        %1050 = vmatmul.mubr.f32.gmra.mxu0 %v876
        %v1051 = vpop.f32.mrf.mxu0
        %v1052 = vadd.f32 %v863, %v1051
        %v1053 = vpop.f32.mrf.mxu0
        %v1054 = vadd.f32 %v863, %v1053
        %1055 = vdwg.mxu0
        %v1056 = vmax.f32 %v945, 0.0
        %v1057 = vmax.f32 %v947, 0.0
        %v1058 = vmax.f32 %v1034, 0.0
        %v1059 = vmax.f32 %v1036, 0.0
        %v1060 = vmax.f32 %v951, 0.0
        %v1061 = vmax.f32 %v953, 0.0
        %v1062 = vmax.f32 %v1040, 0.0
        %v1063 = vmax.f32 %v1042, 0.0
        %v1064 = vmax.f32 %v957, 0.0
        %v1065 = vmax.f32 %v959, 0.0
        %v1066 = vmax.f32 %v1046, 0.0
        %v1067 = vmax.f32 %v1048, 0.0
        %v1068 = vmax.f32 %v963, 0.0
        %v1069 = vmax.f32 %v965, 0.0
        %v1070 = vmax.f32 %v1052, 0.0
        %v1071 = vmax.f32 %v1054, 0.0
        %v1072 = vld [vmem:[%s5] sm:$0x1]
        %v1073 = vld [vmem:[#allocation2] sm:$0x1]
        %1075 = vset.pattern.permute.xlu0 0
        %1076 = vperm.xlu0 %1075, %v1073
        %v1077 = vpop.permute.xlu0 %1076
        %v1079 = vlaneseq
        %v1080 = vshrl.u32 %v1079, 7
        %v1081 = vsub.s32 0, %v1080
        %v1082 = vrot.slane %v1077, %v1081
        %v1084 = vsel %vm865, %v1072, 0
        %1086 = vmatprep.subr.mxu0 0.0
        %1087 = vmatpush1.msra.mxu0 0.0
        %1088 = vmatprep.subr.mxu0 0.0
        %1089 = vmatpush1.msra.mxu0 0.0
        %1090 = vmatprep.subr.mxu0 0.0
        %1091 = vmatpush1.msra.mxu0 0.0
        %1092 = vmatprep.subr.mxu0 0.0
        %1093 = vmatpush1.msra.mxu0 0.0
        %1094 = vmatprep.subr.mxu0 0.0
        %1095 = vmatpush1.msra.mxu0 0.0
        %1096 = vmatprep.subr.mxu0 0.0
        %1097 = vmatpush1.msra.mxu0 0.0
        %1098 = vmatprep.subr.mxu0 0.0
        %1099 = vmatpush1.msra.mxu0 0.0
        %1100 = vmatprep.subr.mxu0 0.0
        %1101 = vmatpush1.msra.mxu0 0.0
        %1102 = vmatprep.subr.mxu0 0.0
        %1103 = vmatpush1.msra.mxu0 0.0
        %1104 = vmatprep.subr.mxu0 0.0
        %1105 = vmatpush1.msra.mxu0 0.0
        %1106 = vmatprep.subr.mxu0 0.0
        %1107 = vmatpush1.msra.mxu0 0.0
        %1108 = vmatprep.subr.mxu0 0.0
        %1109 = vmatpush1.msra.mxu0 0.0
        %1110 = vmatprep.subr.mxu0 %v1069
        %1111 = vmatpush1.msra.mxu0 %v1068
        %1112 = vmatprep.subr.mxu0 %v1065
        %1113 = vmatpush1.msra.mxu0 %v1064
        %1114 = vmatprep.subr.mxu0 %v1061
        %1115 = vmatpush1.msra.mxu0 %v1060
        %1116 = vmatprep.subr.mxu0 %v1057
        %1117 = vmatpush1.msra.mxu0 %v1056
        %1118 = vmatprep.subr.mxu0 0.0
        %1119 = vmatpush2.msra.mxu0 0.0
        %1120 = vmatprep.subr.mxu0 0.0
        %1121 = vmatpush2.msra.mxu0 0.0
        %1122 = vmatprep.subr.mxu0 0.0
        %1123 = vmatpush2.msra.mxu0 0.0
        %1124 = vmatprep.subr.mxu0 0.0
        %1125 = vmatpush2.msra.mxu0 0.0
        %1126 = vmatprep.subr.mxu0 0.0
        %1127 = vmatpush2.msra.mxu0 0.0
        %1128 = vmatprep.subr.mxu0 0.0
        %1129 = vmatpush2.msra.mxu0 0.0
        %1130 = vmatprep.subr.mxu0 0.0
        %1131 = vmatpush2.msra.mxu0 0.0
        %1132 = vmatprep.subr.mxu0 0.0
        %1133 = vmatpush2.msra.mxu0 0.0
        %1134 = vmatprep.subr.mxu0 0.0
        %1135 = vmatpush2.msra.mxu0 0.0
        %1136 = vmatprep.subr.mxu0 0.0
        %1137 = vmatpush2.msra.mxu0 0.0
        %1138 = vmatprep.subr.mxu0 0.0
        %1139 = vmatpush2.msra.mxu0 0.0
        %1140 = vmatprep.subr.mxu0 0.0
        %1141 = vmatpush2.msra.mxu0 0.0
        %1142 = vmatprep.subr.mxu0 0.0
        %1143 = vmatpush2.msra.mxu0 0.0
        %1144 = vmatprep.subr.mxu0 0.0
        %1145 = vmatpush2.msra.mxu0 0.0
        %1146 = vmatprep.subr.mxu0 0.0
        %1147 = vmatpush2.msra.mxu0 0.0
        %1148 = vmatprep.subr.mxu0 0.0
        %1149 = vmatpush2.msra.mxu0 0.0
        %1150 = vmatprep.mubr.f32.mxu0 0.0
        %1151 = vmatmul.mubr.f32.gmra.mxu0 %v1084
        %v1152 = vpop.f32.mrf.mxu0
        %v1153 = vadd.f32 %v1082, %v1152
        %v1154 = vpop.f32.mrf.mxu0
        %v1155 = vadd.f32 %v1082, %v1154
        %1156 = vdwg.mxu0
        %1157 = vmatprep.subr.mxu0 0.0
        %1158 = vmatpush1.msra.mxu0 0.0
        %1159 = vmatprep.subr.mxu0 0.0
        %1160 = vmatpush1.msra.mxu0 0.0
        %1161 = vmatprep.subr.mxu0 0.0
        %1162 = vmatpush1.msra.mxu0 0.0
        %1163 = vmatprep.subr.mxu0 0.0
        %1164 = vmatpush1.msra.mxu0 0.0
        %1165 = vmatprep.subr.mxu0 0.0
        %1166 = vmatpush1.msra.mxu0 0.0
        %1167 = vmatprep.subr.mxu0 0.0
        %1168 = vmatpush1.msra.mxu0 0.0
        %1169 = vmatprep.subr.mxu0 0.0
        %1170 = vmatpush1.msra.mxu0 0.0
        %1171 = vmatprep.subr.mxu0 0.0
        %1172 = vmatpush1.msra.mxu0 0.0
        %1173 = vmatprep.subr.mxu0 0.0
        %1174 = vmatpush1.msra.mxu0 0.0
        %1175 = vmatprep.subr.mxu0 0.0
        %1176 = vmatpush1.msra.mxu0 0.0
        %1177 = vmatprep.subr.mxu0 0.0
        %1178 = vmatpush1.msra.mxu0 0.0
        %1179 = vmatprep.subr.mxu0 0.0
        %1180 = vmatpush1.msra.mxu0 0.0
        %1181 = vmatprep.subr.mxu0 %v1071
        %1182 = vmatpush1.msra.mxu0 %v1070
        %1183 = vmatprep.subr.mxu0 %v1067
        %1184 = vmatpush1.msra.mxu0 %v1066
        %1185 = vmatprep.subr.mxu0 %v1063
        %1186 = vmatpush1.msra.mxu0 %v1062
        %1187 = vmatprep.subr.mxu0 %v1059
        %1188 = vmatpush1.msra.mxu0 %v1058
        %1189 = vmatprep.subr.mxu0 0.0
        %1190 = vmatpush2.msra.mxu0 0.0
        %1191 = vmatprep.subr.mxu0 0.0
        %1192 = vmatpush2.msra.mxu0 0.0
        %1193 = vmatprep.subr.mxu0 0.0
        %1194 = vmatpush2.msra.mxu0 0.0
        %1195 = vmatprep.subr.mxu0 0.0
        %1196 = vmatpush2.msra.mxu0 0.0
        %1197 = vmatprep.subr.mxu0 0.0
        %1198 = vmatpush2.msra.mxu0 0.0
        %1199 = vmatprep.subr.mxu0 0.0
        %1200 = vmatpush2.msra.mxu0 0.0
        %1201 = vmatprep.subr.mxu0 0.0
        %1202 = vmatpush2.msra.mxu0 0.0
        %1203 = vmatprep.subr.mxu0 0.0
        %1204 = vmatpush2.msra.mxu0 0.0
        %1205 = vmatprep.subr.mxu0 0.0
        %1206 = vmatpush2.msra.mxu0 0.0
        %1207 = vmatprep.subr.mxu0 0.0
        %1208 = vmatpush2.msra.mxu0 0.0
        %1209 = vmatprep.subr.mxu0 0.0
        %1210 = vmatpush2.msra.mxu0 0.0
        %1211 = vmatprep.subr.mxu0 0.0
        %1212 = vmatpush2.msra.mxu0 0.0
        %1213 = vmatprep.subr.mxu0 0.0
        %1214 = vmatpush2.msra.mxu0 0.0
        %1215 = vmatprep.subr.mxu0 0.0
        %1216 = vmatpush2.msra.mxu0 0.0
        %1217 = vmatprep.subr.mxu0 0.0
        %1218 = vmatpush2.msra.mxu0 0.0
        %1219 = vmatprep.subr.mxu0 0.0
        %1220 = vmatpush2.msra.mxu0 0.0
        %1221 = vmatprep.mubr.f32.mxu0 0.0
        %1222 = vmatmul.mubr.f32.gmra.mxu0 %v1084
        %v1223 = vpop.f32.mrf.mxu0
        %v1224 = vadd.f32 %v1082, %v1223
        %v1225 = vpop.f32.mrf.mxu0
        %v1226 = vadd.f32 %v1082, %v1225
        %1227 = vdwg.mxu0
        %v1232 = vcombine.low %v1153, %v1155
        %v1233 = vcombine.low %v1224, %v1226
        %v1235 = vunpack.c.l.s4 1966171168
        %v1236 = vunpack.c.0.s8 %v1235
        %v1237 = vlaneseq
        %v1238 = vshrl.u32 %v1237, 7
        %v1239 = vsub.s32 %v1236, %v1238
        %v1240 = vrot.slane %v1232, %v1239
        %v1242 = vunpack.c.l.s4 1966171168
        %v1243 = vunpack.c.0.s8 %v1242
        %v1244 = vlaneseq
        %v1245 = vshrl.u32 %v1244, 7
        %v1246 = vsub.s32 %v1243, %v1245
        %v1247 = vrot.slane %v1233, %v1246
        %v1248 = vcombine.low %v1240, %v1247
        %v1250 = vunpack.c.l.s4 1966171168
        %v1251 = vunpack.c.0.s8 %v1250
        %v1252 = vlaneseq
        %v1253 = vshrl.u32 %v1252, 7
        %v1254 = vsub.s32 %v1251, %v1253
        %v1255 = vrot.slane %v1248, %v1254
        %v1257 = vlaneseq
        %vm1258 = vcmp.ge.s32.totalorder %v1257, 0
        %vm1259 = vcmp.lt.s32.totalorder %v1257, 512
        %vm1260 = vmand %vm1258, %vm1259
        %1261 = vst.msk [vmem:[%s274] sm:$0xf] %vm1260, %v1255
        %s1262 = sand.u32 %s183, 1
        %s1263 = scalar_lea.sflag [#allocation4], %s1262
        %s1264 = sand.u32 %s183, 1
        %s1265 = smul.addr %s1264, 4
        %s1266 = scalar_lea.vmem [#allocation3], %s1265
        // Predicated region
        $region49: #{tpu_custom_call.1} parent=47 // pred_check
          %p1267 = pneg %p193
        $region50: #{tpu_custom_call.1} parent=47 // pred_check_branch
          %1269 = sbr.rel (%p1267) target = $region52
        $region51: #{tpu_custom_call.1} parent=47 // pred_region
          %s1270 = smul.u32 4, %s23
          %s1272 = ssub.s32 64, 64
          %1273 = vsyncadd %s1263, %s1272
          %s1274 = smul.addr %s1270, 16
          %s1275 = scalar_lea.hbm %s7, %s1274
          %s1277 = sshll.u32 %s1266, 4
          %s1278 = int_to_ptr.vmem [resolvable:$true] %s1277
          %1280 = dma.vmem_to_hbm [thread:$0]  %s1278, 64, %s1275, %s1263
        $region52: #{tpu_custom_call.1} parent=47 // pred_fallthru
          _
      $region48: #{tpu_custom_call.1} parent=5 // pred_fallthru
        _
      %p1281 = scmp.le.s32.totalorder 2, %s18
      // Predicated region
      $region53: #{tpu_custom_call.1} parent=5 // pred_check
        %p1282 = pneg %p1281
      $region54: #{tpu_custom_call.1} parent=5 // pred_check_branch
        %1284 = sbr.rel (%p1282) target = $region56
      $region55: #{tpu_custom_call.1} parent=5 // pred_region
        %s1285 = ssub.s32 %s18, 2
        // Predicated region
        $region57: #{tpu_custom_call.1} parent=55 // pred_check
          %p1286 = pneg %p199
        $region58: #{tpu_custom_call.1} parent=55 // pred_check_branch
          %1288 = sbr.rel (%p1286) target = $region60
        $region59: #{tpu_custom_call.1} parent=55 // pred_region
          %s1289 = sand.u32 %s184, 1
          %s1290 = scalar_lea.sflag [#allocation4], %s1289
          %s1291 = sand.u32 %s184, 1
          %s1292 = smul.addr %s1291, 4
          %s1293 = scalar_lea.vmem [#allocation3], %s1292
          %1294 = dma.done %s1290, 64
        $region60: #{tpu_custom_call.1} parent=55 // pred_fallthru
          _
      $region56: #{tpu_custom_call.1} parent=5 // pred_fallthru
        _
    $region6: #{tpu_custom_call.1} parent=1 // loop_footer
      %s22 = sadd.s32 1, %s18
    $region7: #{tpu_custom_call.1} parent=1 // loop_footer_branch
      %17 = sbr.rel target = $region3
    $region8: #{tpu_custom_call.1} parent=1 // loop_exit
      _
    %1295 = vsyncpa [#allocation4], 1
    %s1296 = scalar_lea.sflag [#allocation4], 1
    %1297 = vsyncpa %s1296, 1

</llo_original>
